<compile_context>
chip_gen: v6e
topology: v6e:2x2x1
jax: 0.10.0
libtpu: 0.0.40
codegen_flags: <defaults>
</compile_context>

<pallas_src>
import jax
import jax.numpy as jnp
from jax.experimental import pallas as pl
from jax.experimental.pallas import tpu as pltpu


def _round_up(x: int, m: int) -> int:
    return ((x + m - 1) // m) * m


def _cdiv(a: int, b: int) -> int:
    return (a + b - 1) // b


def mlp_kernel(x_ref, w1_ref, b1_ref, w2_ref, b2_ref, o_ref):
    # fc1: in-kernel f32->bf16 cast of the activation tile (free on the VPU),
    # MXU matmul with f32 accumulation; bias + ReLU in f32 (v5e-safe).
    x = x_ref[...].astype(jnp.bfloat16)
    h = jnp.dot(x, w1_ref[...], preferred_element_type=jnp.float32)
    h = jnp.maximum(h + b1_ref[...], 0.0)
    # fc2: cast the activation back to bf16 for the MXU, accumulate in f32.
    y = jnp.dot(h.astype(jnp.bfloat16), w2_ref[...],
                preferred_element_type=jnp.float32)
    o_ref[...] = (y + b2_ref[...]).astype(o_ref.dtype)


def prepare_params(w1, b1, w2, b2):
    """One-time (hoisted) parameter prep.

    w1: (In, H), w2: (H, Out) f32 (already transposed from PyTorch's (out, in));
    b1: (H,), b2: (Out,). Returns bf16 MXU weights and (1, .) f32 biases.
    """
    return (jnp.asarray(w1, jnp.bfloat16),
            jnp.asarray(b1, jnp.float32).reshape(1, -1),
            jnp.asarray(w2, jnp.bfloat16),
            jnp.asarray(b2, jnp.float32).reshape(1, -1))


def _choose_batch_tile(B: int, block_b: int) -> int:
    b16 = _round_up(B, 16)
    tb = min(_round_up(block_b, 16), b16)
    # v7x has 2 TensorCores: guarantee >= 2 grid steps along the "parallel"
    # batch axis whenever the batch allows it (no cost on single-TC v5e/v6e).
    if b16 >= 32:
        tb = min(tb, _round_up(_cdiv(b16, 2), 16))
    return max(tb, 16)


def simple_nn_forward(x, params, *, block_b: int = 1024):
    """x: (B, In) f32; params = prepare_params(w1, b1, w2, b2)."""
    w1, b1, w2, b2 = params
    B, In = x.shape
    H = w1.shape[1]
    Out = w2.shape[1]

    if B <= 128:
        # Small-shape path: one grid step, block dims == full array dims
        # (full-dim exception to the (8,128) constraint), no wrapper ops.
        TB, B_p = B, B
    else:
        TB = _choose_batch_tile(B, block_b)
        B_p = _cdiv(B, TB) * TB
        if B_p != B:
            # Only wrapper op on the hot path, and only when B doesn't divide.
            x = jnp.pad(x, ((0, B_p - B), (0, 0)))
    num_tiles = B_p // TB

    flops = 2 * B_p * (In * H + H * Out)
    bytes_accessed = (B_p * In * x.dtype.itemsize
                      + w1.size * 2 + w2.size * 2
                      + b1.size * 4 + b2.size * 4
                      + B_p * Out * 4)

    out = pl.pallas_call(
        mlp_kernel,
        out_shape=jax.ShapeDtypeStruct((B_p, Out), jnp.float32),
        grid_spec=pltpu.PrefetchScalarGridSpec(
            num_scalar_prefetch=0,
            grid=(num_tiles,),
            in_specs=[
                # Activations stream per batch tile (f32, cast in-kernel).
                pl.BlockSpec((TB, In), lambda i: (i, 0)),
                # Weights / biases: constant block index -> VMEM-resident.
                pl.BlockSpec((In, H), lambda i: (0, 0)),
                pl.BlockSpec((1, H), lambda i: (0, 0)),
                pl.BlockSpec((H, Out), lambda i: (0, 0)),
                pl.BlockSpec((1, Out), lambda i: (0, 0)),
            ],
            # Only Out real lanes are written (no 128-lane write amplification).
            out_specs=pl.BlockSpec((TB, Out), lambda i: (i, 0)),
        ),
        compiler_params=pltpu.CompilerParams(
            dimension_semantics=("parallel",),
            vmem_limit_bytes=32 * 1024 * 1024,
        ),
        cost_estimate=pl.CostEstimate(
            flops=flops, transcendentals=0, bytes_accessed=bytes_accessed),
    )(x, w1, b1, w2, b2)

    return out if B_p == B else out[:B]


def reference_forward_bf16(x, w1, b1, w2, b2):
    """Emulates the kernel's numerics: bf16 MXU operands, f32 accumulate."""
    f32 = jnp.float32
    bf = lambda a: a.astype(jnp.bfloat16).astype(f32)
    h = jnp.maximum(bf(x) @ bf(w1) + b1.astype(f32), 0.0)
    return bf(h) @ bf(w2) + b2.astype(f32)


if __name__ == "__main__":
    # Shapes implied by the module: input_size=32, hidden_size=64, output_size=16.
    input_size, hidden_size, output_size = 32, 64, 16

    key = jax.random.PRNGKey(0)
    kx, kw1, kb1, kw2, kb2 = jax.random.split(key, 5)

    # Deterministic synthetic params (PyTorch layout pre-transposed to (in, out),
    # PyTorch-style (H,)/(Out,) biases handled by prepare_params).
    w1 = jax.random.normal(kw1, (input_size, hidden_size), dtype=jnp.float32) * 0.1
    b1 = jax.random.normal(kb1, (hidden_size,), dtype=jnp.float32) * 0.1
    w2 = jax.random.normal(kw2, (hidden_size, output_size), dtype=jnp.float32) * 0.1
    b2 = jax.random.normal(kb2, (output_size,), dtype=jnp.float32) * 0.1
    params = prepare_params(w1, b1, w2, b2)

    # batch=32 exercises the single-step small-shape path;
    # batch=160 exercises the batch-tiled / megacore path (2 grid steps of 80).
    for batch in (32, 160):
        x = jax.random.normal(kx, (batch, input_size), dtype=jnp.float32)
        out = jax.block_until_ready(simple_nn_forward(x, params, block_b=1024))
        ref = reference_forward_bf16(x, w1, b1, w2, b2)
        assert out.shape == (batch, output_size)
        assert jnp.allclose(out, ref, atol=1e-2, rtol=1e-2), (
            batch, float(jnp.max(jnp.abs(out - ref))))

    print("KERNEL_OK")
</pallas_src>

<mosaic_0001>
module attributes {stable_mosaic.version = 11 : i64} {
  func.func @mlp_kernel(%arg0: i32, %arg1: memref<32x32xf32, #tpu.memory_space<vmem>>, %arg2: memref<32x64xbf16, #tpu.memory_space<vmem>>, %arg3: memref<1x64xf32, #tpu.memory_space<vmem>>, %arg4: memref<64x16xbf16, #tpu.memory_space<vmem>>, %arg5: memref<1x16xf32, #tpu.memory_space<vmem>>, %arg6: memref<32x16xf32, #tpu.memory_space<vmem>>) attributes {dimension_semantics = [#tpu.dimension_semantics<parallel>], iteration_bounds = array<i64: 1>, scalar_prefetch = 0 : i64, scratch_operands = 0 : i64, tpu.core_type = #tpu.core_type<tc>, window_params = [{transform_indices = @transform_0, window_bounds = array<i64: 32, 32>}, {pipeline_mode = #tpu.pipeline_mode<synchronous>, transform_indices = @transform_1, window_bounds = array<i64: 32, 64>}, {pipeline_mode = #tpu.pipeline_mode<synchronous>, transform_indices = @transform_2, window_bounds = array<i64: 1, 64>}, {pipeline_mode = #tpu.pipeline_mode<synchronous>, transform_indices = @transform_3, window_bounds = array<i64: 64, 16>}, {pipeline_mode = #tpu.pipeline_mode<synchronous>, transform_indices = @transform_4, window_bounds = array<i64: 1, 16>}, {transform_indices = @transform_5, window_bounds = array<i64: 32, 16>}]} {
    %c0 = arith.constant 0 : index
    %c0_0 = arith.constant 0 : index
    %0 = vector.load %arg1[%c0, %c0_0] : memref<32x32xf32, #tpu.memory_space<vmem>>, vector<32x32xf32>
    %1 = arith.truncf %0 : vector<32x32xf32> to vector<32x32xbf16>
    %c0_1 = arith.constant 0 : index
    %c0_2 = arith.constant 0 : index
    %2 = vector.load %arg2[%c0_1, %c0_2] : memref<32x64xbf16, #tpu.memory_space<vmem>>, vector<32x64xbf16>
    %cst = arith.constant dense<0.000000e+00> : vector<32x64xf32>
    %3 = tpu.matmul %1, %2, %cst {dimension_numbers = #tpu.dot_dimension_numbers<[1], [0], [0], [1], [0, 0, 1, 1], [], []>} : vector<32x32xbf16>, vector<32x64xbf16>, vector<32x64xf32> -> vector<32x64xf32>
    %c0_3 = arith.constant 0 : index
    %c0_4 = arith.constant 0 : index
    %4 = vector.load %arg3[%c0_3, %c0_4] : memref<1x64xf32, #tpu.memory_space<vmem>>, vector<1x64xf32>
    %5 = vector.broadcast %4 : vector<1x64xf32> to vector<32x64xf32>
    %6 = arith.addf %3, %5 : vector<32x64xf32>
    %cst_5 = arith.constant 0.000000e+00 : f32
    %7 = vector.broadcast %cst_5 : f32 to vector<32x64xf32>
    %8 = arith.maximumf %6, %7 : vector<32x64xf32>
    %9 = arith.truncf %8 : vector<32x64xf32> to vector<32x64xbf16>
    %c0_6 = arith.constant 0 : index
    %c0_7 = arith.constant 0 : index
    %10 = vector.load %arg4[%c0_6, %c0_7] : memref<64x16xbf16, #tpu.memory_space<vmem>>, vector<64x16xbf16>
    %cst_8 = arith.constant dense<0.000000e+00> : vector<32x16xf32>
    %11 = tpu.matmul %9, %10, %cst_8 {dimension_numbers = #tpu.dot_dimension_numbers<[1], [0], [0], [1], [0, 0, 1, 1], [], []>} : vector<32x64xbf16>, vector<64x16xbf16>, vector<32x16xf32> -> vector<32x16xf32>
    %c0_9 = arith.constant 0 : index
    %c0_10 = arith.constant 0 : index
    %12 = vector.load %arg5[%c0_9, %c0_10] : memref<1x16xf32, #tpu.memory_space<vmem>>, vector<1x16xf32>
    %13 = vector.broadcast %12 : vector<1x16xf32> to vector<32x16xf32>
    %14 = arith.addf %11, %13 : vector<32x16xf32>
    %c0_11 = arith.constant 0 : index
    %c0_12 = arith.constant 0 : index
    %15 = vector.load %arg6[%c0_11, %c0_12] : memref<32x16xf32, #tpu.memory_space<vmem>>, vector<32x16xf32>
    tpu.vector_store %arg6[%c0_11, %c0_12], %14 {strides = array<i32>} : memref<32x16xf32, #tpu.memory_space<vmem>>, vector<32x16xf32>,
    return
  }
  func.func @transform_0(%arg0: i32) -> (i32, i32) {
    %c0_i32 = arith.constant 0 : i32
    %c0_i32_0 = arith.constant 0 : i32
    return %arg0, %c0_i32 : i32, i32
  }
  func.func @transform_1(%arg0: i32) -> (i32, i32) {
    %c0_i32 = arith.constant 0 : i32
    %c0_i32_0 = arith.constant 0 : i32
    %c0_i32_1 = arith.constant 0 : i32
    return %c0_i32, %c0_i32_0 : i32, i32
  }
  func.func @transform_2(%arg0: i32) -> (i32, i32) {
    %c0_i32 = arith.constant 0 : i32
    %c0_i32_0 = arith.constant 0 : i32
    %c0_i32_1 = arith.constant 0 : i32
    return %c0_i32, %c0_i32_0 : i32, i32
  }
  func.func @transform_3(%arg0: i32) -> (i32, i32) {
    %c0_i32 = arith.constant 0 : i32
    %c0_i32_0 = arith.constant 0 : i32
    %c0_i32_1 = arith.constant 0 : i32
    return %c0_i32, %c0_i32_0 : i32, i32
  }
  func.func @transform_4(%arg0: i32) -> (i32, i32) {
    %c0_i32 = arith.constant 0 : i32
    %c0_i32_0 = arith.constant 0 : i32
    %c0_i32_1 = arith.constant 0 : i32
    return %c0_i32, %c0_i32_0 : i32, i32
  }
  func.func @transform_5(%arg0: i32) -> (i32, i32) {
    %c0_i32 = arith.constant 0 : i32
    %c0_i32_0 = arith.constant 0 : i32
    return %arg0, %c0_i32 : i32, i32
  }
}

</mosaic_0001>

<llo_original>
// kernel: tpu_custom_call.1
$region0: #{tpu_custom_call.1}
  #allocation0 [shape = 'u32[]', space=smem, size = 0x4, offset = 0x4, fixed_abs, tag = 'smem constant byte address 0x4 - core index']
  #allocation1 [shape = 'u32[144,128]{1,0:T(1,128)}', space=vmem, size = 0x12000, scoped, tag = 'internal scratch']
  %s0 = inlined_call_operand.vmem [shape: f32[32,32], index: 0, kind: input, shape index: {}]
  %s1 = inlined_call_operand.hbm [shape: bf16[32,64], index: 1, kind: input, shape index: {}]
  %s2 = inlined_call_operand.vmem [shape: f32[1,64], index: 2, kind: input, shape index: {}]
  %s3 = inlined_call_operand.vmem [shape: bf16[64,16], index: 3, kind: input, shape index: {}]
  %s4 = inlined_call_operand.vmem [shape: f32[1,16], index: 4, kind: input, shape index: {}]
  %s5 = inlined_call_operand.vmem [shape: f32[32,16], index: 5, kind: output, shape index: {}]
  %s6 = sld [smem:[#allocation0]]
  $region34: #{tpu_custom_call.1} parent=0
    _
  %s8 = ssub.s32 1, %s6
  %s9 = scalar_select 0, %s8, %s6
  $region1: #{tpu_custom_call.1} parent=0
    #allocation2 [shape = 'u8[8192]{0}', space=vmem, size = 0x2000, scoped, tag = 'input window, operand 1, single buffered']
    #allocation3 [shape = 's32[1]{0}', space=sflag, size = 0x4, scoped, tag = 'scoped memory for tpu_custom_call.1']
    %10 = vsyncpa [#allocation3], 0
    // Predicated region
    $region2: #{tpu_custom_call.1} parent=1 // pred_check
      _
    $region3: #{tpu_custom_call.1} parent=1 // pred_check_branch
      %12 = sbr.rel (0) target = $region5
    $region4: #{tpu_custom_call.1} parent=1 // pred_region
      _
    $region5: #{tpu_custom_call.1} parent=1 // pred_fallthru
      _
    // Predicated region
    $region6: #{tpu_custom_call.1} parent=1 // pred_check
      _
    $region7: #{tpu_custom_call.1} parent=1 // pred_check_branch
      %14 = sbr.rel (0) target = $region9
    $region8: #{tpu_custom_call.1} parent=1 // pred_region
      %s16 = ssub.s32 256, 256
      %17 = vsyncadd [#allocation3], %s16
      %s18 = sshll.u32 [#allocation2], 4
      %s19 = int_to_ptr.vmem [resolvable:$true] %s18
      %24 = dma.hbm_to_vmem [thread:$0]  %s1, 256, %s19, [#allocation3], 64, 64, 4
    $region9: #{tpu_custom_call.1} parent=1 // pred_fallthru
      _
    // Predicated region
    $region10: #{tpu_custom_call.1} parent=1 // pred_check
      _
    $region11: #{tpu_custom_call.1} parent=1 // pred_check_branch
      %26 = sbr.rel (0) target = $region13
    $region12: #{tpu_custom_call.1} parent=1 // pred_region
      _
    $region13: #{tpu_custom_call.1} parent=1 // pred_fallthru
      _
    // Predicated region
    $region14: #{tpu_custom_call.1} parent=1 // pred_check
      _
    $region15: #{tpu_custom_call.1} parent=1 // pred_check_branch
      %28 = sbr.rel (0) target = $region17
    $region16: #{tpu_custom_call.1} parent=1 // pred_region
      _
    $region17: #{tpu_custom_call.1} parent=1 // pred_fallthru
      _
    // Predicated region
    $region18: #{tpu_custom_call.1} parent=1 // pred_check
      _
    $region19: #{tpu_custom_call.1} parent=1 // pred_check_branch
      %30 = sbr.rel (0) target = $region21
    $region20: #{tpu_custom_call.1} parent=1 // pred_region
      _
    $region21: #{tpu_custom_call.1} parent=1 // pred_fallthru
      _
    // Predicated region
    $region22: #{tpu_custom_call.1} parent=1 // pred_check
      _
    $region23: #{tpu_custom_call.1} parent=1 // pred_check_branch
      %32 = sbr.rel (0) target = $region25
    $region24: #{tpu_custom_call.1} parent=1 // pred_region
      %33 = dma.done [#allocation3], 256
    $region25: #{tpu_custom_call.1} parent=1 // pred_fallthru
      _
    %v35 = vld [vmem:[%s0] sm:$0xff]
    %v36 = vld [vmem:[%s0 + $0x8] sm:$0xff]
    %v37 = vld [vmem:[%s0 + $0x10] sm:$0xff]
    %v38 = vld [vmem:[%s0 + $0x18] sm:$0xff]
    %v39 = vpack.c.bf16 %v36, %v35
    %v40 = vpack.c.bf16 %v38, %v37
    %v41 = vld [vmem:[#allocation2] sm:$0xf]
    %v42 = vld [vmem:[#allocation2 + $0x4] sm:$0xf]
    %v43 = vld [vmem:[#allocation2 + $0x8] sm:$0xf]
    %v44 = vld [vmem:[#allocation2 + $0xc] sm:$0xf]
    %v45 = vld [vmem:[%s2] sm:$0x1]
    %v47 = vlaneseq
    %v48 = vshrl.u32 %v47, 7
    %v49 = vsub.s32 0, %v48
    %v50 = vrot.slane %v45, %v49
    %v56 = vunpack.c.l.b16 %v41
    %v57 = vunpack.c.l.b16 %v42
    %v58 = vunpack.c.l.b16 %v43
    %v59 = vunpack.c.l.b16 %v44
    %v60 = vpack.c.b16 %v57, %v56
    %v61 = vpack.c.b16 %v59, %v58
    %vm64 = vcmask 261120
    %v66 = vsel %vm64, %v39, 0
    %v69 = vsel %vm64, %v40, 0
    %71 = vmatprep.subr.bf16.mxu0 0
    %72 = vmatpush1.bf16.msra.mxu0 0
    %73 = vmatprep.subr.bf16.mxu0 0
    %74 = vmatpush1.bf16.msra.mxu0 0
    %75 = vmatprep.subr.bf16.mxu0 0
    %76 = vmatpush1.bf16.msra.mxu0 0
    %77 = vmatprep.subr.bf16.mxu0 0
    %78 = vmatpush1.bf16.msra.mxu0 0
    %79 = vmatprep.subr.bf16.mxu0 0
    %80 = vmatpush1.bf16.msra.mxu0 0
    %81 = vmatprep.subr.bf16.mxu0 0
    %82 = vmatpush1.bf16.msra.mxu0 0
    %83 = vmatprep.subr.bf16.mxu0 0
    %84 = vmatpush1.bf16.msra.mxu0 %v61
    %85 = vmatprep.subr.bf16.mxu0 0
    %86 = vmatpush1.bf16.msra.mxu0 %v60
    %87 = vmatprep.subr.bf16.mxu0 0
    %88 = vmatpush2.bf16.msra.mxu0 0
    %89 = vmatprep.subr.bf16.mxu0 0
    %90 = vmatpush2.bf16.msra.mxu0 0
    %91 = vmatprep.subr.bf16.mxu0 0
    %92 = vmatpush2.bf16.msra.mxu0 0
    %93 = vmatprep.subr.bf16.mxu0 0
    %94 = vmatpush2.bf16.msra.mxu0 0
    %95 = vmatprep.subr.bf16.mxu0 0
    %96 = vmatpush2.bf16.msra.mxu0 0
    %97 = vmatprep.subr.bf16.mxu0 0
    %98 = vmatpush2.bf16.msra.mxu0 0
    %99 = vmatprep.subr.bf16.mxu0 0
    %100 = vmatpush2.bf16.msra.mxu0 0
    %101 = vmatprep.subr.bf16.mxu0 0
    %102 = vmatpush2.bf16.msra.mxu0 0
    %103 = vmatprep.mubr.bf16.mxu0 0
    %104 = vmatmul.mubr.bf16.gmra.mxu0 %v66
    %v105 = vpop.f32.mrf.mxu0
    %v106 = vadd.f32 %v50, %v105
    %v107 = vpop.f32.mrf.mxu0
    %v108 = vpop.f32.mrf.mxu0
    %v109 = vadd.f32 %v50, %v108
    %v110 = vpop.f32.mrf.mxu0
    %111 = vmatprep.mubr.bf16.mxu0 0
    %112 = vmatmul.mubr.bf16.gmra.mxu0 %v69
    %v113 = vpop.f32.mrf.mxu0
    %v114 = vadd.f32 %v50, %v113
    %v115 = vpop.f32.mrf.mxu0
    %v116 = vpop.f32.mrf.mxu0
    %v117 = vadd.f32 %v50, %v116
    %v118 = vpop.f32.mrf.mxu0
    %119 = vdwg.mxu0
    %v120 = vmax.f32 %v106, 0.0
    %v121 = vmax.f32 %v109, 0.0
    %v122 = vmax.f32 %v114, 0.0
    %v123 = vmax.f32 %v117, 0.0
    %v124 = vpack.c.bf16 %v121, %v120
    %v125 = vpack.c.bf16 %v123, %v122
    %v126 = vld [vmem:[%s3] sm:$0xf]
    %v127 = vld [vmem:[%s3 + $0x4] sm:$0xf]
    %v128 = vld [vmem:[%s3 + $0x8] sm:$0xf]
    %v129 = vld [vmem:[%s3 + $0xc] sm:$0xf]
    %v130 = vld [vmem:[%s3 + $0x10] sm:$0xf]
    %v131 = vld [vmem:[%s3 + $0x14] sm:$0xf]
    %v132 = vld [vmem:[%s3 + $0x18] sm:$0xf]
    %v133 = vld [vmem:[%s3 + $0x1c] sm:$0xf]
    %v134 = vld [vmem:[%s4] sm:$0x1]
    %v136 = vlaneseq
    %v137 = vshrl.u32 %v136, 7
    %v138 = vsub.s32 0, %v137
    %v139 = vrot.slane %v134, %v138
    %v149 = vunpack.c.l.b16 %v126
    %v150 = vunpack.c.l.b16 %v127
    %v151 = vunpack.c.l.b16 %v128
    %v152 = vunpack.c.l.b16 %v129
    %v153 = vunpack.c.l.b16 %v130
    %v154 = vunpack.c.l.b16 %v131
    %v155 = vunpack.c.l.b16 %v132
    %v156 = vunpack.c.l.b16 %v133
    %v157 = vpack.c.b16 %v150, %v149
    %v158 = vpack.c.b16 %v152, %v151
    %v159 = vpack.c.b16 %v154, %v153
    %v160 = vpack.c.b16 %v156, %v155
    %vm165 = vcmask 523264
    %v167 = vsel %vm165, %v124, 0
    %v170 = vsel %vm165, %v125, 0
    %172 = vmatprep.subr.bf16.mxu0 0
    %173 = vmatpush1.bf16.msra.mxu0 0
    %174 = vmatprep.subr.bf16.mxu0 0
    %175 = vmatpush1.bf16.msra.mxu0 0
    %176 = vmatprep.subr.bf16.mxu0 0
    %177 = vmatpush1.bf16.msra.mxu0 0
    %178 = vmatprep.subr.bf16.mxu0 0
    %179 = vmatpush1.bf16.msra.mxu0 0
    %180 = vmatprep.subr.bf16.mxu0 0
    %181 = vmatpush1.bf16.msra.mxu0 %v160
    %182 = vmatprep.subr.bf16.mxu0 0
    %183 = vmatpush1.bf16.msra.mxu0 %v159
    %184 = vmatprep.subr.bf16.mxu0 0
    %185 = vmatpush1.bf16.msra.mxu0 %v158
    %186 = vmatprep.subr.bf16.mxu0 0
    %187 = vmatpush1.bf16.msra.mxu0 %v157
    %188 = vmatprep.subr.bf16.mxu0 0
    %189 = vmatpush2.bf16.msra.mxu0 0
    %190 = vmatprep.subr.bf16.mxu0 0
    %191 = vmatpush2.bf16.msra.mxu0 0
    %192 = vmatprep.subr.bf16.mxu0 0
    %193 = vmatpush2.bf16.msra.mxu0 0
    %194 = vmatprep.subr.bf16.mxu0 0
    %195 = vmatpush2.bf16.msra.mxu0 0
    %196 = vmatprep.subr.bf16.mxu0 0
    %197 = vmatpush2.bf16.msra.mxu0 0
    %198 = vmatprep.subr.bf16.mxu0 0
    %199 = vmatpush2.bf16.msra.mxu0 0
    %200 = vmatprep.subr.bf16.mxu0 0
    %201 = vmatpush2.bf16.msra.mxu0 0
    %202 = vmatprep.subr.bf16.mxu0 0
    %203 = vmatpush2.bf16.msra.mxu0 0
    %204 = vmatprep.mubr.bf16.mxu0 0
    %205 = vmatmul.mubr.bf16.gmra.mxu0 %v167
    %v206 = vpop.f32.mrf.mxu0
    %v207 = vadd.f32 %v139, %v206
    %v208 = vpop.f32.mrf.mxu0
    %v209 = vpop.f32.mrf.mxu0
    %v210 = vadd.f32 %v139, %v209
    %v211 = vpop.f32.mrf.mxu0
    %212 = vmatprep.mubr.bf16.mxu0 0
    %213 = vmatmul.mubr.bf16.gmra.mxu0 %v170
    %v214 = vpop.f32.mrf.mxu0
    %v215 = vadd.f32 %v139, %v214
    %v216 = vpop.f32.mrf.mxu0
    %v217 = vpop.f32.mrf.mxu0
    %v218 = vadd.f32 %v139, %v217
    %v219 = vpop.f32.mrf.mxu0
    %220 = vdwg.mxu0
    %vm221 = vcmask 130048
    %222 = vst.msk [vmem:[%s5] sm:$0xff] %vm221, %v207
    %223 = vst.msk [vmem:[%s5 + $0x8] sm:$0xff] %vm221, %v210
    %224 = vst.msk [vmem:[%s5 + $0x10] sm:$0xff] %vm221, %v215
    %225 = vst.msk [vmem:[%s5 + $0x18] sm:$0xff] %vm221, %v218
    // Predicated region
    $region26: #{tpu_custom_call.1} parent=1 // pred_check
      _
    $region27: #{tpu_custom_call.1} parent=1 // pred_check_branch
      %227 = sbr.rel (0) target = $region29
    $region28: #{tpu_custom_call.1} parent=1 // pred_region
      _
    $region29: #{tpu_custom_call.1} parent=1 // pred_fallthru
      _
    // Predicated region
    $region30: #{tpu_custom_call.1} parent=1 // pred_check
      _
    $region31: #{tpu_custom_call.1} parent=1 // pred_check_branch
      %229 = sbr.rel (0) target = $region33
    $region32: #{tpu_custom_call.1} parent=1 // pred_region
      _
    $region33: #{tpu_custom_call.1} parent=1 // pred_fallthru
      _
    %230 = vsyncpa [#allocation3], 1

</llo_original>
